<compile_context>
chip_gen: v7x
topology: tpu7x:2x2x1
jax: 0.10.0
libtpu: 0.0.40
codegen_flags: <defaults>
</compile_context>

<pallas_src>
import math
from functools import partial

import jax
import jax.numpy as jnp
from jax.experimental import pallas as pl
from jax.experimental.pallas import tpu as pltpu


# TODO(synk): per-generation budget — v7x has only 64 MiB/TC, v6e/v5e have 128 MiB.
_VMEM_LIMIT_BYTES = 64 * 1024 * 1024


def _layer_norm(x, g, b, eps=1e-5):
    mu = jnp.mean(x, axis=-1, keepdims=True)
    xc = x - mu
    var = jnp.mean(xc * xc, axis=-1, keepdims=True)
    return xc * jax.lax.rsqrt(var + eps) * g + b


# ----------------------------------------------------------------------------
# Kernel 1: query-independent value projections, hoisted out of the layer so
# they are not recomputed per query tile.  Outputs are bf16 MXU operands.
# ----------------------------------------------------------------------------
def _value_proj_kernel(tgt_ref, pos_ref, src_ref, c_vw, c_vb, s_vw, s_vb,
                       cval_ref, sval_ref, *, mxu_dtype):
    f32 = jnp.float32
    # cross-attn value input is (tgt + query_pos), self-attn value input is src
    q = (tgt_ref[0].astype(f32) + pos_ref[0].astype(f32)).astype(mxu_dtype)
    cval = jnp.dot(q, c_vw[...], preferred_element_type=f32) + c_vb[...]
    cval_ref[0] = cval.astype(cval_ref.dtype)
    s = src_ref[0].astype(mxu_dtype)
    sval = jnp.dot(s, s_vw[...], preferred_element_type=f32) + s_vb[...]
    sval_ref[0] = sval.astype(sval_ref.dtype)


# ----------------------------------------------------------------------------
# Kernel 2: fused decoder layer (cross deform-attn -> add+LN1 -> self deform-attn
# -> add+LN2 -> FFN -> add+LN3), gridded over (batch, query-tile).
# ----------------------------------------------------------------------------
def _ms_decoder_layer_kernel(
        tgt_ref, pos_ref, ref_ref, cval_ref, sval_ref,
        c_sw, c_sb, c_ow, c_ob, n1_g, n1_b,
        s_sw, s_sb, s_ow, s_ob, n2_g, n2_b,
        l1_w, l1_b, l2_w, l2_b, n3_g, n3_b,
        out_ref, *, H, L, P, D, lens, starts, mxu_dtype):
    f32 = jnp.float32
    LP = L * P
    HLP = H * LP

    def deform_attn(query, value, refp, sw, sb, ow, ob):
        # query: (TQ, C) f32   value: (T, C) mxu_dtype (pre-projected)   refp: (TQ, L*D)
        TQ, C = query.shape
        hd = C // H

        # fused sampling_offsets | attention_weights projection (one lane-dense matmul)
        proj = jnp.dot(query.astype(mxu_dtype), sw[...],
                       preferred_element_type=f32) + sb[...]            # (TQ, 2*H*L*P)
        off = proj[:, :HLP]
        logits = proj[:, HLP:]

        # per-head softmax over L*P: lane-dense exp, small per-head reductions,
        # exact division (parity with torch softmax).
        mx = jnp.concatenate(
            [jnp.broadcast_to(
                jnp.max(logits[:, h * LP:(h + 1) * LP], axis=-1, keepdims=True),
                (TQ, LP)) for h in range(H)], axis=1)
        expw = jnp.exp(logits - mx)                                       # (TQ, HLP)
        den = jnp.concatenate(
            [jnp.broadcast_to(
                jnp.sum(expw[:, h * LP:(h + 1) * LP], axis=-1, keepdims=True),
                (TQ, LP)) for h in range(H)], axis=1)
        attn = expw / den

        # lane-dense sampling math for all H*L*P points at once
        col = jax.lax.broadcasted_iota(jnp.int32, (1, HLP), 1)
        lev = (col // P) % L                        # level id per column (h,l,p order)
        t_len = jnp.zeros((1, HLP), f32)
        inv_t = jnp.zeros((1, HLP), f32)
        ref_c = jnp.zeros((TQ, HLP), f32)
        wid_c = jnp.zeros((TQ, HLP), f32)
        for l in range(L):
            sel = lev == l
            t_len = jnp.where(sel, float(lens[l]), t_len)
            inv_t = jnp.where(sel, 1.0 / float(lens[l]), inv_t)
            ref_c = jnp.where(sel, refp[:, l * D:l * D + 1], ref_c)
            if D == 2:
                wid_c = jnp.where(sel, refp[:, l * D + 1:l * D + 2], wid_c)
        if D == 1:
            loc = ref_c + off * inv_t
        else:  # D == 2: center + width formulation
            loc = ref_c + off * (0.5 / float(P)) * wid_c
        # grid_sample, align_corners=False, zero padding, linear interpolation
        x = loc * t_len - 0.5
        x0 = jnp.floor(x)
        fr = x - x0
        i0 = x0.astype(jnp.int32)
        v0 = ((x0 >= 0.0) & (x0 <= t_len - 1.0)).astype(f32)   # i0   in bounds
        v1 = ((x0 >= -1.0) & (x0 <= t_len - 2.0)).astype(f32)  # i0+1 in bounds
        w0 = (1.0 - fr) * attn * v0                                      # (TQ, HLP)
        w1 = fr * attn * v1

        # per-level interpolation matrices (TQ, T_l) -> MXU matmuls against that
        # level's value rows; heads concatenated, ONE output_proj matmul at the end.
        # TODO(synk): at realistic H*L*P (~192) switch the head loop to lax.fori_loop
        # with a VMEM scratch slab to bound live ranges / compile time.
        heads = []
        for h in range(H):
            acc_h = jnp.zeros((TQ, hd), f32)
            for l in range(L):
                T_l, s_l = lens[l], starts[l]
                iota_l = jax.lax.broadcasted_iota(jnp.int32, (TQ, T_l), 1)
                A = jnp.zeros((TQ, T_l), f32)
                for p in range(P):
                    c0 = h * LP + l * P + p
                    delta = iota_l - i0[:, c0:c0 + 1]
                    A = A + jnp.where(delta == 0, w0[:, c0:c0 + 1],
                                      jnp.where(delta == 1, w1[:, c0:c0 + 1], 0.0))
                acc_h = acc_h + jnp.dot(
                    A.astype(mxu_dtype), value[s_l:s_l + T_l, h * hd:(h + 1) * hd],
                    preferred_element_type=f32)
            heads.append(acc_h)
        sampled = jnp.concatenate(heads, axis=1)                         # (TQ, C)
        return jnp.dot(sampled.astype(mxu_dtype), ow[...],
                       preferred_element_type=f32) + ob[...]

    tgt = tgt_ref[0].astype(f32)
    pos = pos_ref[0].astype(f32)
    refp = ref_ref[0].astype(f32)

    # cross-attn: q = tgt + query_pos, value = value_proj(tgt + query_pos) (precomputed)
    q = tgt + pos
    t2 = deform_attn(q, cval_ref[0], refp, c_sw, c_sb, c_ow, c_ob)
    tgt = _layer_norm(tgt + t2, n1_g[...], n1_b[...])

    # self-attn: q = tgt + query_pos, value = value_proj(src) (precomputed)
    q = tgt + pos
    t2 = deform_attn(q, sval_ref[0], refp, s_sw, s_sb, s_ow, s_ob)
    tgt = _layer_norm(tgt + t2, n2_g[...], n2_b[...])

    # FFN: linear1 + ReLU + linear2, intermediate never leaves VMEM
    h1 = jnp.maximum(
        jnp.dot(tgt.astype(mxu_dtype), l1_w[...], preferred_element_type=f32)
        + l1_b[...], 0.0)
    t2 = jnp.dot(h1.astype(mxu_dtype), l2_w[...], preferred_element_type=f32) + l2_b[...]
    out_ref[0] = _layer_norm(tgt + t2, n3_g[...], n3_b[...]).astype(out_ref.dtype)


# ----------------------------------------------------------------------------
# Wrapper (mirrors DeformableTransformerMSDecoderLayer.forward)
# ----------------------------------------------------------------------------
def _pick_query_tile(lq, requested):
    if requested is None or requested >= lq:
        return lq
    t = min(requested, lq)
    while t > 1:
        if lq % t == 0 and (t % 8 == 0 or t == lq):
            return t
        t -= 1
    return lq


def ms_decoder_layer_forward(params, tgt, query_pos, reference_points, src,
                             src_temporal_lens, level_start_index,
                             tgt_temporal_lens=None, tgt_level_start_index=None,
                             query_tile=256, mxu_dtype=jnp.bfloat16):
    # tgt_temporal_lens / tgt_level_start_index are accepted but unused, exactly as in
    # the PyTorch forward.
    bs, Lq, C = tgt.shape
    T = src.shape[1]
    lens = tuple(int(t) for t in src_temporal_lens)      # baked in -> recompile on change
    starts = tuple(int(s) for s in level_start_index)
    L = len(lens)
    H = params['nhead']
    P = params['npoints']
    D = reference_points.shape[-1]
    assert C % H == 0
    # The forward as written samples the cross-attn value (= tgt + query_pos) and the
    # self-attn value (= src) with the same src_spatial_shapes / level_start_index.
    assert sum(lens) == T and sum(lens) == Lq, \
        "forward as written requires sum(src lens) == len(src) == len(tgt)"

    if query_pos is None:
        query_pos = jnp.zeros_like(tgt)

    f32 = jnp.float32
    c, s = params['cross_attn'], params['self_attn']

    def wcast(x):        # MXU-operand weights -> bf16 (halves HBM/VMEM traffic)
        return jnp.asarray(x, mxu_dtype)

    refp = reference_points.reshape(bs, Lq, L * D).astype(f32)

    # ---------------- hoisted value projections (grid over batch) ----------------
    def vp_batch(shape):
        nd = len(shape)
        return pl.BlockSpec((1,) + shape, lambda b, _n=nd: (b,) + (0,) * _n)

    def vp_const(shape):
        nd = len(shape)
        return pl.BlockSpec(shape, lambda b, _n=nd: (0,) * _n)

    cval, sval = pl.pallas_call(
        partial(_value_proj_kernel, mxu_dtype=mxu_dtype),
        grid=(bs,),
        out_shape=(jax.ShapeDtypeStruct((bs, Lq, C), mxu_dtype),
                   jax.ShapeDtypeStruct((bs, T, C), mxu_dtype)),
        in_specs=[vp_batch((Lq, C)), vp_batch((Lq, C)), vp_batch((T, C)),
                  vp_const(c['value_proj']['w'].shape),
                  vp_const(c['value_proj']['b'].shape),
                  vp_const(s['value_proj']['w'].shape),
                  vp_const(s['value_proj']['b'].shape)],
        out_specs=(vp_batch((Lq, C)), vp_batch((T, C))),
        compiler_params=pltpu.CompilerParams(
            dimension_semantics=("parallel",),
            vmem_limit_bytes=_VMEM_LIMIT_BYTES),
    )(tgt, query_pos, src,
      wcast(c['value_proj']['w']), jnp.asarray(c['value_proj']['b'], f32),
      wcast(s['value_proj']['w']), jnp.asarray(s['value_proj']['b'], f32))

    # ---------------- fused layer kernel (grid over batch x query tiles) ----------
    tq = _pick_query_tile(Lq, query_tile)
    n_qt = Lq // tq

    def tile_spec(last):
        return pl.BlockSpec((1, tq, last), lambda b, qi: (b, qi, 0))

    def full_seq(shape):
        nd = len(shape)
        return pl.BlockSpec((1,) + shape, lambda b, qi, _n=nd: (b,) + (0,) * _n)

    def w_spec(shape):
        nd = len(shape)
        # TODO(synk): pipeline_mode=pl.Buffered(1) (or a one-shot scratch DMA) would stop
        # double-buffering these constant-index weight blocks in VMEM at realistic sizes.
        return pl.BlockSpec(shape, lambda b, qi, _n=nd: (0,) * _n)

    w_list = [
        wcast(c['so_aw']['w']), jnp.asarray(c['so_aw']['b'], f32),
        wcast(c['output_proj']['w']), jnp.asarray(c['output_proj']['b'], f32),
        jnp.asarray(params['norm1']['g'], f32), jnp.asarray(params['norm1']['b'], f32),
        wcast(s['so_aw']['w']), jnp.asarray(s['so_aw']['b'], f32),
        wcast(s['output_proj']['w']), jnp.asarray(s['output_proj']['b'], f32),
        jnp.asarray(params['norm2']['g'], f32), jnp.asarray(params['norm2']['b'], f32),
        wcast(params['linear1']['w']), jnp.asarray(params['linear1']['b'], f32),
        wcast(params['linear2']['w']), jnp.asarray(params['linear2']['b'], f32),
        jnp.asarray(params['norm3']['g'], f32), jnp.asarray(params['norm3']['b'], f32),
    ]

    in_specs = [tile_spec(C), tile_spec(C), tile_spec(L * D),
                full_seq((Lq, C)), full_seq((T, C))]
    in_specs += [w_spec(w.shape) for w in w_list]

    kernel = partial(_ms_decoder_layer_kernel, H=H, L=L, P=P, D=D,
                     lens=lens, starts=starts, mxu_dtype=mxu_dtype)

    return pl.pallas_call(
        kernel,
        grid=(bs, n_qt),
        out_shape=jax.ShapeDtypeStruct((bs, Lq, C), f32),
        in_specs=in_specs,
        out_specs=tile_spec(C),
        compiler_params=pltpu.CompilerParams(
            dimension_semantics=("parallel", "parallel"),
            vmem_limit_bytes=_VMEM_LIMIT_BYTES),
    )(tgt, query_pos, refp, cval, sval, *w_list)


# ----------------------------------------------------------------------------
# Deterministic synthetic parameter init (mirrors module __init__ shapes).
# NOTE (porting trap): weights are stored as (in, out) and applied as x @ W; when
# loading real nn.Linear checkpoints, transpose the (out, in) PyTorch weights and
# respect the fused so_aw column ordering (sampling_offsets | attention_weights).
# ----------------------------------------------------------------------------
def _xavier(key, shape):
    fan_in, fan_out = shape
    limit = math.sqrt(6.0 / (fan_in + fan_out))
    return jax.random.uniform(key, shape, jnp.float32, -limit, limit)


def init_ms_decoder_layer_params(key, d_model=32, d_ffn=64,
                                 n_heads=4, n_levels=2, n_points=2):
    kit = iter(jax.random.split(key, 64))
    nk = lambda: next(kit)  # noqa: E731
    C = d_model

    def lin(din, dout):
        return {'w': _xavier(nk(), (din, dout)),
                'b': jnp.zeros((1, dout), jnp.float32)}

    def ln():
        return {'g': jnp.ones((1, C), jnp.float32),
                'b': jnp.zeros((1, C), jnp.float32)}

    def deform(L):
        so = lin(C, n_heads * L * n_points)   # sampling_offsets
        aw = lin(C, n_heads * L * n_points)   # attention_weights
        return {
            'value_proj': lin(C, C),
            # fused (sampling_offsets | attention_weights): one lane-dense matmul
            'so_aw': {'w': jnp.concatenate([so['w'], aw['w']], axis=1),
                      'b': jnp.concatenate([so['b'], aw['b']], axis=1)},
            'output_proj': lin(C, C),
        }

    return {
        'nhead': n_heads, 'npoints': n_points,
        'cross_attn': deform(n_levels),
        'self_attn': deform(n_levels),
        'norm1': ln(), 'norm2': ln(), 'norm3': ln(),
        'linear1': lin(C, d_ffn),
        'linear2': lin(d_ffn, C),
    }


# ----------------------------------------------------------------------------
if __name__ == "__main__":
    C, H, L, P, Fd = 32, 4, 2, 2, 64          # d_model, heads, levels, points, d_ffn
    lens = (16, 8)                            # per-level temporal lengths of src
    starts = (0, 16)                          # level_start_index
    T = sum(lens)
    bs, Lq = 2, T                             # forward requires len(tgt) == sum(src lens)

    key = jax.random.PRNGKey(0)
    k_t, k_pos, k_src, k_ref, k_par = jax.random.split(key, 5)
    tgt = jax.random.normal(k_t, (bs, Lq, C), jnp.float32)
    query_pos = jax.random.normal(k_pos, (bs, Lq, C), jnp.float32)
    src = jax.random.normal(k_src, (bs, T, C), jnp.float32)
    reference_points = jax.nn.sigmoid(
        jax.random.normal(k_ref, (bs, Lq, L, 1), jnp.float32))

    params = init_ms_decoder_layer_params(k_par, d_model=C, d_ffn=Fd,
                                          n_heads=H, n_levels=L, n_points=P)

    out = ms_decoder_layer_forward(params, tgt, query_pos, reference_points, src,
                                   lens, starts, lens, starts,
                                   query_tile=8)   # exercise the query-tile grid axis
    out = jax.block_until_ready(out)

    assert out.shape == (bs, Lq, C)
    assert bool(jnp.all(jnp.isfinite(out)))
    print("KERNEL_OK")
</pallas_src>

<mosaic_0001>
module attributes {stable_mosaic.version = 11 : i64} {
  func.func @_value_proj_kernel(%arg0: i32, %arg1: memref<1x24x32xf32, #tpu.memory_space<vmem>>, %arg2: memref<1x24x32xf32, #tpu.memory_space<vmem>>, %arg3: memref<1x24x32xf32, #tpu.memory_space<vmem>>, %arg4: memref<32x32xbf16, #tpu.memory_space<vmem>>, %arg5: memref<1x32xf32, #tpu.memory_space<vmem>>, %arg6: memref<32x32xbf16, #tpu.memory_space<vmem>>, %arg7: memref<1x32xf32, #tpu.memory_space<vmem>>, %arg8: memref<1x24x32xbf16, #tpu.memory_space<vmem>>, %arg9: memref<1x24x32xbf16, #tpu.memory_space<vmem>>) attributes {dimension_semantics = [#tpu.dimension_semantics<parallel>], iteration_bounds = array<i64: 2>, scalar_prefetch = 0 : i64, scratch_operands = 0 : i64, tpu.core_type = #tpu.core_type<tc>, window_params = [{transform_indices = @transform_0, window_bounds = array<i64: 1, 24, 32>}, {transform_indices = @transform_1, window_bounds = array<i64: 1, 24, 32>}, {transform_indices = @transform_2, window_bounds = array<i64: 1, 24, 32>}, {pipeline_mode = #tpu.pipeline_mode<synchronous>, transform_indices = @transform_3, window_bounds = array<i64: 32, 32>}, {pipeline_mode = #tpu.pipeline_mode<synchronous>, transform_indices = @transform_4, window_bounds = array<i64: 1, 32>}, {pipeline_mode = #tpu.pipeline_mode<synchronous>, transform_indices = @transform_5, window_bounds = array<i64: 32, 32>}, {pipeline_mode = #tpu.pipeline_mode<synchronous>, transform_indices = @transform_6, window_bounds = array<i64: 1, 32>}, {transform_indices = @transform_7, window_bounds = array<i64: 1, 24, 32>}, {transform_indices = @transform_8, window_bounds = array<i64: 1, 24, 32>}]} {
    %c0 = arith.constant 0 : index
    %c0_0 = arith.constant 0 : index
    %c0_1 = arith.constant 0 : index
    %0 = vector.load %arg1[%c0, %c0_0, %c0_1] : memref<1x24x32xf32, #tpu.memory_space<vmem>>, vector<1x24x32xf32>
    %1 = vector.shape_cast %0 : vector<1x24x32xf32> to vector<24x32xf32>
    %c0_2 = arith.constant 0 : index
    %c0_3 = arith.constant 0 : index
    %c0_4 = arith.constant 0 : index
    %2 = vector.load %arg2[%c0_2, %c0_3, %c0_4] : memref<1x24x32xf32, #tpu.memory_space<vmem>>, vector<1x24x32xf32>
    %3 = vector.shape_cast %2 : vector<1x24x32xf32> to vector<24x32xf32>
    %4 = arith.addf %1, %3 : vector<24x32xf32>
    %5 = arith.truncf %4 : vector<24x32xf32> to vector<24x32xbf16>
    %c0_5 = arith.constant 0 : index
    %c0_6 = arith.constant 0 : index
    %6 = vector.load %arg4[%c0_5, %c0_6] : memref<32x32xbf16, #tpu.memory_space<vmem>>, vector<32x32xbf16>
    %cst = arith.constant dense<0.000000e+00> : vector<24x32xf32>
    %7 = tpu.matmul %5, %6, %cst {dimension_numbers = #tpu.dot_dimension_numbers<[1], [0], [0], [1], [0, 0, 1, 1], [], []>} : vector<24x32xbf16>, vector<32x32xbf16>, vector<24x32xf32> -> vector<24x32xf32>
    %c0_7 = arith.constant 0 : index
    %c0_8 = arith.constant 0 : index
    %8 = vector.load %arg5[%c0_7, %c0_8] : memref<1x32xf32, #tpu.memory_space<vmem>>, vector<1x32xf32>
    %9 = vector.broadcast %8 : vector<1x32xf32> to vector<24x32xf32>
    %10 = arith.addf %7, %9 : vector<24x32xf32>
    %11 = arith.truncf %10 : vector<24x32xf32> to vector<24x32xbf16>
    %c0_9 = arith.constant 0 : index
    %c0_10 = arith.constant 0 : index
    %c0_11 = arith.constant 0 : index
    %12 = vector.load %arg8[%c0_9, %c0_10, %c0_11] : memref<1x24x32xbf16, #tpu.memory_space<vmem>>, vector<1x24x32xbf16>
    %13 = vector.shape_cast %12 : vector<1x24x32xbf16> to vector<24x32xbf16>
    %14 = vector.shape_cast %11 : vector<24x32xbf16> to vector<1x24x32xbf16>
    tpu.vector_store %arg8[%c0_9, %c0_10, %c0_11], %14 {strides = array<i32>} : memref<1x24x32xbf16, #tpu.memory_space<vmem>>, vector<1x24x32xbf16>,
    %c0_12 = arith.constant 0 : index
    %c0_13 = arith.constant 0 : index
    %c0_14 = arith.constant 0 : index
    %15 = vector.load %arg3[%c0_12, %c0_13, %c0_14] : memref<1x24x32xf32, #tpu.memory_space<vmem>>, vector<1x24x32xf32>
    %16 = vector.shape_cast %15 : vector<1x24x32xf32> to vector<24x32xf32>
    %17 = arith.truncf %16 : vector<24x32xf32> to vector<24x32xbf16>
    %c0_15 = arith.constant 0 : index
    %c0_16 = arith.constant 0 : index
    %18 = vector.load %arg6[%c0_15, %c0_16] : memref<32x32xbf16, #tpu.memory_space<vmem>>, vector<32x32xbf16>
    %cst_17 = arith.constant dense<0.000000e+00> : vector<24x32xf32>
    %19 = tpu.matmul %17, %18, %cst_17 {dimension_numbers = #tpu.dot_dimension_numbers<[1], [0], [0], [1], [0, 0, 1, 1], [], []>} : vector<24x32xbf16>, vector<32x32xbf16>, vector<24x32xf32> -> vector<24x32xf32>
    %c0_18 = arith.constant 0 : index
    %c0_19 = arith.constant 0 : index
    %20 = vector.load %arg7[%c0_18, %c0_19] : memref<1x32xf32, #tpu.memory_space<vmem>>, vector<1x32xf32>
    %21 = vector.broadcast %20 : vector<1x32xf32> to vector<24x32xf32>
    %22 = arith.addf %19, %21 : vector<24x32xf32>
    %23 = arith.truncf %22 : vector<24x32xf32> to vector<24x32xbf16>
    %c0_20 = arith.constant 0 : index
    %c0_21 = arith.constant 0 : index
    %c0_22 = arith.constant 0 : index
    %24 = vector.load %arg9[%c0_20, %c0_21, %c0_22] : memref<1x24x32xbf16, #tpu.memory_space<vmem>>, vector<1x24x32xbf16>
    %25 = vector.shape_cast %24 : vector<1x24x32xbf16> to vector<24x32xbf16>
    %26 = vector.shape_cast %23 : vector<24x32xbf16> to vector<1x24x32xbf16>
    tpu.vector_store %arg9[%c0_20, %c0_21, %c0_22], %26 {strides = array<i32>} : memref<1x24x32xbf16, #tpu.memory_space<vmem>>, vector<1x24x32xbf16>,
    return
  }
  func.func @transform_0(%arg0: i32) -> (i32, i32, i32) {
    %c0_i32 = arith.constant 0 : i32
    %c0_i32_0 = arith.constant 0 : i32
    %c0_i32_1 = arith.constant 0 : i32
    return %arg0, %c0_i32, %c0_i32_0 : i32, i32, i32
  }
  func.func @transform_1(%arg0: i32) -> (i32, i32, i32) {
    %c0_i32 = arith.constant 0 : i32
    %c0_i32_0 = arith.constant 0 : i32
    %c0_i32_1 = arith.constant 0 : i32
    return %arg0, %c0_i32, %c0_i32_0 : i32, i32, i32
  }
  func.func @transform_2(%arg0: i32) -> (i32, i32, i32) {
    %c0_i32 = arith.constant 0 : i32
    %c0_i32_0 = arith.constant 0 : i32
    %c0_i32_1 = arith.constant 0 : i32
    return %arg0, %c0_i32, %c0_i32_0 : i32, i32, i32
  }
  func.func @transform_3(%arg0: i32) -> (i32, i32) {
    %c0_i32 = arith.constant 0 : i32
    %c0_i32_0 = arith.constant 0 : i32
    %c0_i32_1 = arith.constant 0 : i32
    return %c0_i32, %c0_i32_0 : i32, i32
  }
  func.func @transform_4(%arg0: i32) -> (i32, i32) {
    %c0_i32 = arith.constant 0 : i32
    %c0_i32_0 = arith.constant 0 : i32
    %c0_i32_1 = arith.constant 0 : i32
    return %c0_i32, %c0_i32_0 : i32, i32
  }
  func.func @transform_5(%arg0: i32) -> (i32, i32) {
    %c0_i32 = arith.constant 0 : i32
    %c0_i32_0 = arith.constant 0 : i32
    %c0_i32_1 = arith.constant 0 : i32
    return %c0_i32, %c0_i32_0 : i32, i32
  }
  func.func @transform_6(%arg0: i32) -> (i32, i32) {
    %c0_i32 = arith.constant 0 : i32
    %c0_i32_0 = arith.constant 0 : i32
    %c0_i32_1 = arith.constant 0 : i32
    return %c0_i32, %c0_i32_0 : i32, i32
  }
  func.func @transform_7(%arg0: i32) -> (i32, i32, i32) {
    %c0_i32 = arith.constant 0 : i32
    %c0_i32_0 = arith.constant 0 : i32
    %c0_i32_1 = arith.constant 0 : i32
    return %arg0, %c0_i32, %c0_i32_0 : i32, i32, i32
  }
  func.func @transform_8(%arg0: i32) -> (i32, i32, i32) {
    %c0_i32 = arith.constant 0 : i32
    %c0_i32_0 = arith.constant 0 : i32
    %c0_i32_1 = arith.constant 0 : i32
    return %arg0, %c0_i32, %c0_i32_0 : i32, i32, i32
  }
}

</mosaic_0001>

<llo_original>
// kernel: tpu_custom_call.1
$region0: #{tpu_custom_call.1}
  #allocation0 [shape = 'u32[]', space=smem, size = 0x4, offset = 0x4, fixed_abs, tag = 'smem constant byte address 0x4 - core index']
  #allocation1 [shape = 'u32[144,128]{1,0:T(1,128)}', space=vmem, size = 0x12000, scoped, tag = 'internal scratch']
  %s0 = inlined_call_operand.hbm [shape: f32[2,24,32], index: 0, kind: input, shape index: {}]
  %s1 = inlined_call_operand.hbm [shape: f32[2,24,32], index: 1, kind: input, shape index: {}]
  %s2 = inlined_call_operand.hbm [shape: f32[2,24,32], index: 2, kind: input, shape index: {}]
  %s3 = inlined_call_operand.hbm [shape: bf16[32,32], index: 3, kind: input, shape index: {}]
  %s4 = inlined_call_operand.hbm [shape: f32[1,32], index: 4, kind: input, shape index: {}]
  %s5 = inlined_call_operand.hbm [shape: bf16[32,32], index: 5, kind: input, shape index: {}]
  %s6 = inlined_call_operand.hbm [shape: f32[1,32], index: 6, kind: input, shape index: {}]
  %s7 = inlined_call_operand.hbm [shape: bf16[2,24,32], index: 7, kind: output, shape index: {0}]
  %s8 = inlined_call_operand.hbm [shape: bf16[2,24,32], index: 8, kind: output, shape index: {1}]
  %9 = xla_tuple %s7, %s8
  %s10 = sld [smem:[#allocation0]]
  $region97: #{tpu_custom_call.1} parent=0
    _
  %s12 = ssub.s32 1, %s10
  %s13 = scalar_select 0, %s12, %s10
  $region1: #{tpu_custom_call.1} parent=0
    #allocation2 [shape = 'u8[24576]{0}', space=vmem, size = 0x6000, scoped, tag = 'input window, operand 0']
    #allocation3 [shape = 's32[2]{0}', space=sflag, size = 0x8, scoped, tag = 'scoped memory for tpu_custom_call.1']
    #allocation4 [shape = 's32[2]{0}', space=sflag, size = 0x8, scoped, tag = 'scoped memory for tpu_custom_call.1']
    #allocation5 [shape = 'u8[24576]{0}', space=vmem, size = 0x6000, scoped, tag = 'input window, operand 1']
    #allocation6 [shape = 's32[2]{0}', space=sflag, size = 0x8, scoped, tag = 'scoped memory for tpu_custom_call.1']
    #allocation7 [shape = 'u8[24576]{0}', space=vmem, size = 0x6000, scoped, tag = 'input window, operand 2']
    #allocation8 [shape = 'u8[8192]{0}', space=vmem, size = 0x2000, scoped, tag = 'input window, operand 3, single buffered']
    #allocation9 [shape = 's32[1]{0}', space=sflag, size = 0x4, scoped, tag = 'scoped memory for tpu_custom_call.1']
    #allocation10 [shape = 'u8[512]{0}', space=vmem, size = 0x400, scoped, tag = 'input window, operand 4, single buffered']
    #allocation11 [shape = 'u8[8192]{0}', space=vmem, size = 0x2000, scoped, tag = 'input window, operand 5, single buffered']
    #allocation12 [shape = 's32[1]{0}', space=sflag, size = 0x4, scoped, tag = 'scoped memory for tpu_custom_call.1']
    #allocation13 [shape = 'u8[512]{0}', space=vmem, size = 0x400, scoped, tag = 'input window, operand 6, single buffered']
    #allocation14 [shape = 'u8[12288]{0}', space=vmem, size = 0x3000, scoped, tag = 'output window, operand 0']
    #allocation15 [shape = 'u8[12288]{0}', space=vmem, size = 0x3000, scoped, tag = 'output window, operand 1']
    #allocation16 [shape = 's32[2]{0}', space=sflag, size = 0x8, scoped, tag = 'scoped memory for tpu_custom_call.1']
    %14 = vsyncpa [#allocation3], 0
    %s15 = scalar_lea.sflag [#allocation3], 1
    %16 = vsyncpa %s15, 0
    %17 = vsyncpa [#allocation6], 0
    %s18 = scalar_lea.sflag [#allocation6], 1
    %19 = vsyncpa %s18, 0
    %20 = vsyncpa [#allocation9], 0
    %21 = vsyncpa [#allocation12], 0
    %22 = vsyncpa [#allocation4], 0
    %s23 = scalar_lea.sflag [#allocation4], 1
    %24 = vsyncpa %s23, 0
    %25 = vsyncpa [#allocation16], 0
    %s26 = scalar_lea.sflag [#allocation16], 1
    %27 = vsyncpa %s26, 0
    loop: start=0, step=1, limit=4
    $region2: #{tpu_custom_call.1} parent=1 // loop_pre_header
      _
    $region3: #{tpu_custom_call.1} parent=1 // loop_header
      %s29 = sphi 0, %s33
      %p30 = scmp.ge.s32.totalorder %s29, 4
      %s39 = sphi 0, %s41
      %s42 = sphi 0, %s39
      %s43 = sphi 0, %s42
      %s59 = sphi 0, %s43
      %s65 = sphi 0, %s67
      %s68 = sphi 0, %s65
      %s69 = sphi 0, %s68
      %s85 = sphi 0, %s69
      %s91 = sphi 0, %s93
      %s94 = sphi 0, %s91
      %s95 = sphi 0, %s94
      %s111 = sphi 0, %s95
      %s115 = sphi 0, %s115
      %s117 = sphi 0, %s115
      %s118 = sphi 0, %s117
      %s132 = sphi 0, %s118
      %s136 = sphi 0, %s136
      %s138 = sphi 0, %s136
      %s139 = sphi 0, %s138
      %s153 = sphi 0, %s139
      %s157 = sphi 0, %s157
      %s159 = sphi 0, %s157
      %s160 = sphi 0, %s159
      %s174 = sphi 0, %s160
      %s178 = sphi 0, %s178
      %s180 = sphi 0, %s178
      %s181 = sphi 0, %s180
      %s195 = sphi 0, %s181
      %s201 = sphi 0, %s203
      %s204 = sphi 0, %s201
      %s205 = sphi 0, %s204
      %s221 = sphi 0, %s205
      %s227 = sphi 0, %s229
      %s230 = sphi 0, %s227
      %s231 = sphi 0, %s230
      %s247 = sphi 0, %s231
    $region4: #{tpu_custom_call.1} parent=1 // loop_header_branch
      %32 = sbr.rel (%p30) target = $region8
    $region5: #{tpu_custom_call.1} parent=1 // loop_body
      %s34 = ssub.s32 %s29, 1
      %s35 = ssub.s32 %s29, 2
      %s36 = sadd.s32 %s29, 1
      %s37 = ssub.s32 %s29, %s36
      %p38 = scmp.eq.s32.totalorder %s37, 0
      %s40 = sadd.s32 %s39, 1
      %s41 = scalar_select %p38, %s39, %s40
      %p44 = pneg %p38
      %p45 = scmp.eq.s32.totalorder %s29, 1
      %p46 = por %p44, %p45
      %p47 = scmp.ne.s32.totalorder %s39, %s42
      %p48 = scmp.eq.s32.totalorder %s29, 0
      %p49 = por %p47, %p48
      %p50 = scmp.ne.s32.totalorder %s39, %s42
      %p51 = scmp.eq.s32.totalorder %s34, 1
      %p52 = por %p50, %p51
      %p53 = scmp.ne.s32.totalorder %s42, %s43
      %p54 = scmp.eq.s32.totalorder %s34, 0
      %p55 = por %p53, %p54
      %p56 = scmp.ne.s32.totalorder %s42, %s43
      %p57 = scmp.eq.s32.totalorder %s35, 1
      %p58 = por %p56, %p57
      %p60 = scmp.ne.s32.totalorder %s43, %s59
      %p61 = scmp.eq.s32.totalorder %s35, 0
      %p62 = por %p60, %p61
      %s63 = ssub.s32 %s29, %s36
      %p64 = scmp.eq.s32.totalorder %s63, 0
      %s66 = sadd.s32 %s65, 1
      %s67 = scalar_select %p64, %s65, %s66
      %p70 = pneg %p64
      %p71 = scmp.eq.s32.totalorder %s29, 1
      %p72 = por %p70, %p71
      %p73 = scmp.ne.s32.totalorder %s65, %s68
      %p74 = scmp.eq.s32.totalorder %s29, 0
      %p75 = por %p73, %p74
      %p76 = scmp.ne.s32.totalorder %s65, %s68
      %p77 = scmp.eq.s32.totalorder %s34, 1
      %p78 = por %p76, %p77
      %p79 = scmp.ne.s32.totalorder %s68, %s69
      %p80 = scmp.eq.s32.totalorder %s34, 0
      %p81 = por %p79, %p80
      %p82 = scmp.ne.s32.totalorder %s68, %s69
      %p83 = scmp.eq.s32.totalorder %s35, 1
      %p84 = por %p82, %p83
      %p86 = scmp.ne.s32.totalorder %s69, %s85
      %p87 = scmp.eq.s32.totalorder %s35, 0
      %p88 = por %p86, %p87
      %s89 = ssub.s32 %s29, %s36
      %p90 = scmp.eq.s32.totalorder %s89, 0
      %s92 = sadd.s32 %s91, 1
      %s93 = scalar_select %p90, %s91, %s92
      %p96 = pneg %p90
      %p97 = scmp.eq.s32.totalorder %s29, 1
      %p98 = por %p96, %p97
      %p99 = scmp.ne.s32.totalorder %s91, %s94
      %p100 = scmp.eq.s32.totalorder %s29, 0
      %p101 = por %p99, %p100
      %p102 = scmp.ne.s32.totalorder %s91, %s94
      %p103 = scmp.eq.s32.totalorder %s34, 1
      %p104 = por %p102, %p103
      %p105 = scmp.ne.s32.totalorder %s94, %s95
      %p106 = scmp.eq.s32.totalorder %s34, 0
      %p107 = por %p105, %p106
      %p108 = scmp.ne.s32.totalorder %s94, %s95
      %p109 = scmp.eq.s32.totalorder %s35, 1
      %p110 = por %p108, %p109
      %p112 = scmp.ne.s32.totalorder %s95, %s111
      %p113 = scmp.eq.s32.totalorder %s35, 0
      %p114 = por %p112, %p113
      %s116 = sadd.s32 %s115, 1
      %p119 = scmp.eq.s32.totalorder %s29, 1
      %p120 = scmp.ne.s32.totalorder %s115, %s117
      %p121 = scmp.eq.s32.totalorder %s29, 0
      %p122 = por %p120, %p121
      %p123 = scmp.ne.s32.totalorder %s115, %s117
      %p124 = scmp.eq.s32.totalorder %s34, 1
      %p125 = por %p123, %p124
      %p126 = scmp.ne.s32.totalorder %s117, %s118
      %p127 = scmp.eq.s32.totalorder %s34, 0
      %p128 = por %p126, %p127
      %p129 = scmp.ne.s32.totalorder %s117, %s118
      %p130 = scmp.eq.s32.totalorder %s35, 1
      %p131 = por %p129, %p130
      %p133 = scmp.ne.s32.totalorder %s118, %s132
      %p134 = scmp.eq.s32.totalorder %s35, 0
      %p135 = por %p133, %p134
      %s137 = sadd.s32 %s136, 1
      %p140 = scmp.eq.s32.totalorder %s29, 1
      %p141 = scmp.ne.s32.totalorder %s136, %s138
      %p142 = scmp.eq.s32.totalorder %s29, 0
      %p143 = por %p141, %p142
      %p144 = scmp.ne.s32.totalorder %s136, %s138
      %p145 = scmp.eq.s32.totalorder %s34, 1
      %p146 = por %p144, %p145
      %p147 = scmp.ne.s32.totalorder %s138, %s139
      %p148 = scmp.eq.s32.totalorder %s34, 0
      %p149 = por %p147, %p148
      %p150 = scmp.ne.s32.totalorder %s138, %s139
      %p151 = scmp.eq.s32.totalorder %s35, 1
      %p152 = por %p150, %p151
      %p154 = scmp.ne.s32.totalorder %s139, %s153
      %p155 = scmp.eq.s32.totalorder %s35, 0
      %p156 = por %p154, %p155
      %s158 = sadd.s32 %s157, 1
      %p161 = scmp.eq.s32.totalorder %s29, 1
      %p162 = scmp.ne.s32.totalorder %s157, %s159
      %p163 = scmp.eq.s32.totalorder %s29, 0
      %p164 = por %p162, %p163
      %p165 = scmp.ne.s32.totalorder %s157, %s159
      %p166 = scmp.eq.s32.totalorder %s34, 1
      %p167 = por %p165, %p166
      %p168 = scmp.ne.s32.totalorder %s159, %s160
      %p169 = scmp.eq.s32.totalorder %s34, 0
      %p170 = por %p168, %p169
      %p171 = scmp.ne.s32.totalorder %s159, %s160
      %p172 = scmp.eq.s32.totalorder %s35, 1
      %p173 = por %p171, %p172
      %p175 = scmp.ne.s32.totalorder %s160, %s174
      %p176 = scmp.eq.s32.totalorder %s35, 0
      %p177 = por %p175, %p176
      %s179 = sadd.s32 %s178, 1
      %p182 = scmp.eq.s32.totalorder %s29, 1
      %p183 = scmp.ne.s32.totalorder %s178, %s180
      %p184 = scmp.eq.s32.totalorder %s29, 0
      %p185 = por %p183, %p184
      %p186 = scmp.ne.s32.totalorder %s178, %s180
      %p187 = scmp.eq.s32.totalorder %s34, 1
      %p188 = por %p186, %p187
      %p189 = scmp.ne.s32.totalorder %s180, %s181
      %p190 = scmp.eq.s32.totalorder %s34, 0
      %p191 = por %p189, %p190
      %p192 = scmp.ne.s32.totalorder %s180, %s181
      %p193 = scmp.eq.s32.totalorder %s35, 1
      %p194 = por %p192, %p193
      %p196 = scmp.ne.s32.totalorder %s181, %s195
      %p197 = scmp.eq.s32.totalorder %s35, 0
      %p198 = por %p196, %p197
      %s199 = ssub.s32 %s29, %s36
      %p200 = scmp.eq.s32.totalorder %s199, 0
      %s202 = sadd.s32 %s201, 1
      %s203 = scalar_select %p200, %s201, %s202
      %p206 = pneg %p200
      %p207 = scmp.eq.s32.totalorder %s29, 1
      %p208 = por %p206, %p207
      %p209 = scmp.ne.s32.totalorder %s201, %s204
      %p210 = scmp.eq.s32.totalorder %s29, 0
      %p211 = por %p209, %p210
      %p212 = scmp.ne.s32.totalorder %s201, %s204
      %p213 = scmp.eq.s32.totalorder %s34, 1
      %p214 = por %p212, %p213
      %p215 = scmp.ne.s32.totalorder %s204, %s205
      %p216 = scmp.eq.s32.totalorder %s34, 0
      %p217 = por %p215, %p216
      %p218 = scmp.ne.s32.totalorder %s204, %s205
      %p219 = scmp.eq.s32.totalorder %s35, 1
      %p220 = por %p218, %p219
      %p222 = scmp.ne.s32.totalorder %s205, %s221
      %p223 = scmp.eq.s32.totalorder %s35, 0
      %p224 = por %p222, %p223
      %s225 = ssub.s32 %s29, %s36
      %p226 = scmp.eq.s32.totalorder %s225, 0
      %s228 = sadd.s32 %s227, 1
      %s229 = scalar_select %p226, %s227, %s228
      %p232 = pneg %p226
      %p233 = scmp.eq.s32.totalorder %s29, 1
      %p234 = por %p232, %p233
      %p235 = scmp.ne.s32.totalorder %s227, %s230
      %p236 = scmp.eq.s32.totalorder %s29, 0
      %p237 = por %p235, %p236
      %p238 = scmp.ne.s32.totalorder %s227, %s230
      %p239 = scmp.eq.s32.totalorder %s34, 1
      %p240 = por %p238, %p239
      %p241 = scmp.ne.s32.totalorder %s230, %s231
      %p242 = scmp.eq.s32.totalorder %s34, 0
      %p243 = por %p241, %p242
      %p244 = scmp.ne.s32.totalorder %s230, %s231
      %p245 = scmp.eq.s32.totalorder %s35, 1
      %p246 = por %p244, %p245
      %p248 = scmp.ne.s32.totalorder %s231, %s247
      %p249 = scmp.eq.s32.totalorder %s35, 0
      %p250 = por %p248, %p249
      %p251 = scmp.le.s32.totalorder 1, %s29
      %p252 = scmp.lt.s32.totalorder %s29, 3
      %p253 = pnand %p251, %p252
      %p254 = pneg %p253
      // Predicated region
      $region9: #{tpu_custom_call.1} parent=5 // pred_check
        _
      $region10: #{tpu_custom_call.1} parent=5 // pred_check_branch
        %256 = sbr.rel (%p253) target = $region12
      $region11: #{tpu_custom_call.1} parent=5 // pred_region
        %s257 = ssub.s32 %s29, 1
        // Predicated region
        $region13: #{tpu_custom_call.1} parent=11 // pred_check
          %p258 = pneg %p128
        $region14: #{tpu_custom_call.1} parent=11 // pred_check_branch
          %260 = sbr.rel (%p258) target = $region16
        $region15: #{tpu_custom_call.1} parent=11 // pred_region
          %s262 = ssub.s32 256, 256
          %263 = vsyncadd [#allocation9], %s262
          %s264 = sshll.u32 [#allocation8], 4
          %s265 = int_to_ptr.vmem [resolvable:$true] %s264
          %270 = dma.hbm_to_vmem [thread:$0]  %s3, 256, %s265, [#allocation9], 64, 64, 4
        $region16: #{tpu_custom_call.1} parent=11 // pred_fallthru
          _
        // Predicated region
        $region17: #{tpu_custom_call.1} parent=11 // pred_check
          %p271 = pneg %p149
        $region18: #{tpu_custom_call.1} parent=11 // pred_check_branch
          %273 = sbr.rel (%p271) target = $region20
        $region19: #{tpu_custom_call.1} parent=11 // pred_region
          %s275 = ssub.s32 16, 16
          %276 = vsyncadd [#allocation9], %s275
          %s278 = sshll.u32 [#allocation10], 4
          %s279 = int_to_ptr.vmem [resolvable:$true] %s278
          %281 = dma.hbm_to_vmem [thread:$0]  %s4, 16, %s279, [#allocation9]
        $region20: #{tpu_custom_call.1} parent=11 // pred_fallthru
          _
        // Predicated region
        $region21: #{tpu_custom_call.1} parent=11 // pred_check
          %p282 = pneg %p170
        $region22: #{tpu_custom_call.1} parent=11 // pred_check_branch
          %284 = sbr.rel (%p282) target = $region24
        $region23: #{tpu_custom_call.1} parent=11 // pred_region
          %s286 = ssub.s32 256, 256
          %287 = vsyncadd [#allocation12], %s286
          %s288 = sshll.u32 [#allocation11], 4
          %s289 = int_to_ptr.vmem [resolvable:$true] %s288
          %294 = dma.hbm_to_vmem [thread:$0]  %s5, 256, %s289, [#allocation12], 64, 64, 4
        $region24: #{tpu_custom_call.1} parent=11 // pred_fallthru
          _
        // Predicated region
        $region25: #{tpu_custom_call.1} parent=11 // pred_check
          %p295 = pneg %p191
        $region26: #{tpu_custom_call.1} parent=11 // pred_check_branch
          %297 = sbr.rel (%p295) target = $region28
        $region27: #{tpu_custom_call.1} parent=11 // pred_region
          %s299 = ssub.s32 16, 16
          %300 = vsyncadd [#allocation12], %s299
          %s302 = sshll.u32 [#allocation13], 4
          %s303 = int_to_ptr.vmem [resolvable:$true] %s302
          %305 = dma.hbm_to_vmem [thread:$0]  %s6, 16, %s303, [#allocation12]
        $region28: #{tpu_custom_call.1} parent=11 // pred_fallthru
          _
      $region12: #{tpu_custom_call.1} parent=5 // pred_fallthru
        _
      %p306 = scmp.lt.s32.totalorder %s29, 2
      // Predicated region
      $region29: #{tpu_custom_call.1} parent=5 // pred_check
        %p307 = pneg %p306
      $region30: #{tpu_custom_call.1} parent=5 // pred_check_branch
        %309 = sbr.rel (%p307) target = $region32
      $region31: #{tpu_custom_call.1} parent=5 // pred_region
        // Predicated region
        $region33: #{tpu_custom_call.1} parent=31 // pred_check
          %p310 = pneg %p49
        $region34: #{tpu_custom_call.1} parent=31 // pred_check_branch
          %312 = sbr.rel (%p310) target = $region36
        $region35: #{tpu_custom_call.1} parent=31 // pred_region
          %s313 = sand.u32 %s39, 1
          %s314 = scalar_lea.sflag [#allocation3], %s313
          %s315 = sand.u32 %s39, 1
          %s316 = smul.addr %s315, 24
          %s317 = scalar_lea.vmem [#allocation2], %s316
          %s319 = ssub.s32 384, 384
          %320 = vsyncadd %s314, %s319
          %s321 = smul.addr %s29, 3
          %s322 = smul.addr %s321, 128
          %s323 = scalar_lea.hbm %s0, %s322
          %s324 = sshll.u32 %s317, 4
          %s325 = int_to_ptr.vmem [resolvable:$true] %s324
          %330 = dma.hbm_to_vmem [thread:$0]  %s323, 384, %s325, %s314, 128, 128, 8
        $region36: #{tpu_custom_call.1} parent=31 // pred_fallthru
          _
        // Predicated region
        $region37: #{tpu_custom_call.1} parent=31 // pred_check
          %p331 = pneg %p75
        $region38: #{tpu_custom_call.1} parent=31 // pred_check_branch
          %333 = sbr.rel (%p331) target = $region40
        $region39: #{tpu_custom_call.1} parent=31 // pred_region
          %s334 = sand.u32 %s29, 1
          %s335 = scalar_lea.sflag [#allocation6], %s334
          %s336 = sand.u32 %s65, 1
          %s337 = smul.addr %s336, 24
          %s338 = scalar_lea.vmem [#allocation5], %s337
          %s340 = ssub.s32 384, 384
          %341 = vsyncadd %s335, %s340
          %s342 = smul.addr %s29, 3
          %s343 = smul.addr %s342, 128
          %s344 = scalar_lea.hbm %s1, %s343
          %s345 = sshll.u32 %s338, 4
          %s346 = int_to_ptr.vmem [resolvable:$true] %s345
          %351 = dma.hbm_to_vmem [thread:$0]  %s344, 384, %s346, %s335, 128, 128, 8
        $region40: #{tpu_custom_call.1} parent=31 // pred_fallthru
          _
        // Predicated region
        $region41: #{tpu_custom_call.1} parent=31 // pred_check
          %p352 = pneg %p101
        $region42: #{tpu_custom_call.1} parent=31 // pred_check_branch
          %354 = sbr.rel (%p352) target = $region44
        $region43: #{tpu_custom_call.1} parent=31 // pred_region
          %s355 = sand.u32 %s29, 1
          %s356 = scalar_lea.sflag [#allocation6], %s355
          %s357 = sand.u32 %s91, 1
          %s358 = smul.addr %s357, 24
          %s359 = scalar_lea.vmem [#allocation7], %s358
          %s361 = ssub.s32 384, 384
          %362 = vsyncadd %s356, %s361
          %s363 = smul.addr %s29, 3
          %s364 = smul.addr %s363, 128
          %s365 = scalar_lea.hbm %s2, %s364
          %s366 = sshll.u32 %s359, 4
          %s367 = int_to_ptr.vmem [resolvable:$true] %s366
          %372 = dma.hbm_to_vmem [thread:$0]  %s365, 384, %s367, %s356, 128, 128, 8
        $region44: #{tpu_custom_call.1} parent=31 // pred_fallthru
          _
      $region32: #{tpu_custom_call.1} parent=5 // pred_fallthru
        _
      %p373 = scmp.le.s32.totalorder 1, %s29
      %p374 = scmp.lt.s32.totalorder %s29, 3
      %p375 = pnand %p373, %p374
      %p376 = pneg %p375
      // Predicated region
      $region45: #{tpu_custom_call.1} parent=5 // pred_check
        _
      $region46: #{tpu_custom_call.1} parent=5 // pred_check_branch
        %378 = sbr.rel (%p375) target = $region48
      $region47: #{tpu_custom_call.1} parent=5 // pred_region
        %s379 = ssub.s32 %s29, 1
        %s380 = sand.u32 %s42, 1
        %s381 = scalar_lea.sflag [#allocation3], %s380
        %s382 = sand.u32 %s42, 1
        %s383 = smul.addr %s382, 24
        %s384 = scalar_lea.vmem [#allocation2], %s383
        // Predicated region
        $region49: #{tpu_custom_call.1} parent=47 // pred_check
          %p385 = pneg %p55
        $region50: #{tpu_custom_call.1} parent=47 // pred_check_branch
          %387 = sbr.rel (%p385) target = $region52
        $region51: #{tpu_custom_call.1} parent=47 // pred_region
          %388 = dma.done %s381, 384
        $region52: #{tpu_custom_call.1} parent=47 // pred_fallthru
          _
        %s389 = sand.u32 %s34, 1
        %s390 = scalar_lea.sflag [#allocation6], %s389
        %s391 = sand.u32 %s68, 1
        %s392 = smul.addr %s391, 24
        %s393 = scalar_lea.vmem [#allocation5], %s392
        // Predicated region
        $region53: #{tpu_custom_call.1} parent=47 // pred_check
          %p394 = pneg %p81
        $region54: #{tpu_custom_call.1} parent=47 // pred_check_branch
          %396 = sbr.rel (%p394) target = $region56
        $region55: #{tpu_custom_call.1} parent=47 // pred_region
          %397 = dma.done %s390, 384
        $region56: #{tpu_custom_call.1} parent=47 // pred_fallthru
          _
        %s398 = sand.u32 %s34, 1
        %s399 = scalar_lea.sflag [#allocation6], %s398
        %s400 = sand.u32 %s94, 1
        %s401 = smul.addr %s400, 24
        %s402 = scalar_lea.vmem [#allocation7], %s401
        // Predicated region
        $region57: #{tpu_custom_call.1} parent=47 // pred_check
          %p403 = pneg %p107
        $region58: #{tpu_custom_call.1} parent=47 // pred_check_branch
          %405 = sbr.rel (%p403) target = $region60
        $region59: #{tpu_custom_call.1} parent=47 // pred_region
          %406 = dma.done %s399, 384
        $region60: #{tpu_custom_call.1} parent=47 // pred_fallthru
          _
        // Predicated region
        $region61: #{tpu_custom_call.1} parent=47 // pred_check
          %p407 = pneg %p128
        $region62: #{tpu_custom_call.1} parent=47 // pred_check_branch
          %409 = sbr.rel (%p407) target = $region64
        $region63: #{tpu_custom_call.1} parent=47 // pred_region
          %410 = dma.done [#allocation9], 256
        $region64: #{tpu_custom_call.1} parent=47 // pred_fallthru
          _
        // Predicated region
        $region65: #{tpu_custom_call.1} parent=47 // pred_check
          %p411 = pneg %p149
        $region66: #{tpu_custom_call.1} parent=47 // pred_check_branch
          %413 = sbr.rel (%p411) target = $region68
        $region67: #{tpu_custom_call.1} parent=47 // pred_region
          %414 = dma.done [#allocation9], 16
        $region68: #{tpu_custom_call.1} parent=47 // pred_fallthru
          _
        // Predicated region
        $region69: #{tpu_custom_call.1} parent=47 // pred_check
          %p415 = pneg %p170
        $region70: #{tpu_custom_call.1} parent=47 // pred_check_branch
          %417 = sbr.rel (%p415) target = $region72
        $region71: #{tpu_custom_call.1} parent=47 // pred_region
          %418 = dma.done [#allocation12], 256
        $region72: #{tpu_custom_call.1} parent=47 // pred_fallthru
          _
        // Predicated region
        $region73: #{tpu_custom_call.1} parent=47 // pred_check
          %p419 = pneg %p191
        $region74: #{tpu_custom_call.1} parent=47 // pred_check_branch
          %421 = sbr.rel (%p419) target = $region76
        $region75: #{tpu_custom_call.1} parent=47 // pred_region
          %422 = dma.done [#allocation12], 16
        $region76: #{tpu_custom_call.1} parent=47 // pred_fallthru
          _
        %s423 = sand.u32 %s42, 1
        %s424 = scalar_lea.sflag [#allocation3], %s423
        %s425 = sand.u32 %s42, 1
        %s426 = smul.addr %s425, 24
        %s427 = scalar_lea.vmem [#allocation2], %s426
        %p428 = pneg %p55
        %p429 = pneg %p52
        %s430 = sand.u32 %s34, 1
        %s431 = scalar_lea.sflag [#allocation6], %s430
        %s432 = sand.u32 %s68, 1
        %s433 = smul.addr %s432, 24
        %s434 = scalar_lea.vmem [#allocation5], %s433
        %p435 = pneg %p81
        %p436 = pneg %p78
        %s437 = sand.u32 %s34, 1
        %s438 = scalar_lea.sflag [#allocation6], %s437
        %s439 = sand.u32 %s94, 1
        %s440 = smul.addr %s439, 24
        %s441 = scalar_lea.vmem [#allocation7], %s440
        %p442 = pneg %p107
        %p443 = pneg %p104
        %p444 = pneg %p128
        %p445 = pneg %p125
        %p446 = pneg %p149
        %p447 = pneg %p146
        %p448 = pneg %p170
        %p449 = pneg %p167
        %p450 = pneg %p191
        %p451 = pneg %p188
        %p452 = pneg %p217
        %p453 = pneg %p214
        %s454 = sand.u32 %s204, 1
        %s455 = scalar_lea.sflag [#allocation4], %s454
        %s456 = sand.u32 %s204, 1
        %s457 = smul.addr %s456, 12
        %s458 = scalar_lea.vmem [#allocation14], %s457
        %p459 = pneg %p243
        %p460 = pneg %p240
        %s461 = sand.u32 %s230, 1
        %s462 = scalar_lea.sflag [#allocation16], %s461
        %s463 = sand.u32 %s230, 1
        %s464 = smul.addr %s463, 12
        %s465 = scalar_lea.vmem [#allocation15], %s464
        %v467 = vld [vmem:[%s384] sm:$0xff]
        %v468 = vld [vmem:[%s384 + $0x8] sm:$0xff]
        %v469 = vld [vmem:[%s384 + $0x10] sm:$0xff]
        %v470 = vld [vmem:[%s393] sm:$0xff]
        %v471 = vld [vmem:[%s393 + $0x8] sm:$0xff]
        %v472 = vld [vmem:[%s393 + $0x10] sm:$0xff]
        %v473 = vadd.f32 %v467, %v470
        %v474 = vadd.f32 %v468, %v471
        %v475 = vadd.f32 %v469, %v472
        %v476 = vpack.c.bf16 %v474, %v473
        %v477 = vpack.c.bf16 %v475, %v475
        %v478 = vld [vmem:[#allocation8] sm:$0xf]
        %v479 = vld [vmem:[#allocation8 + $0x4] sm:$0xf]
        %v480 = vld [vmem:[#allocation8 + $0x8] sm:$0xf]
        %v481 = vld [vmem:[#allocation8 + $0xc] sm:$0xf]
        %v482 = vld [vmem:[#allocation10] sm:$0x1]
        %v484 = vlaneseq
        %v485 = vshrl.u32 %v484, 7
        %v486 = vsub.s32 0, %v485
        %v487 = vrot.slane %v482, %v486
        %v493 = vunpack.c.l.b16 %v478
        %v494 = vunpack.c.l.b16 %v479
        %v495 = vunpack.c.l.b16 %v480
        %v496 = vunpack.c.l.b16 %v481
        %v497 = vpack.c.b16 %v494, %v493
        %v498 = vpack.c.b16 %v496, %v495
        %vm501 = vcmask 261120
        %v503 = vsel %vm501, %v476, 0
        %v506 = vsel %vm501, %v477, 0
        %508 = vmatprep.subr.bf16.mxu0 0
        %509 = vmatpush1.bf16.msra.mxu0 %v497
        %510 = vmatprep.subr.bf16.mxu0 0
        %511 = vmatpush1.bf16.msra.mxu0 %v498
        %512 = vmatprep.subr.bf16.mxu0 0
        %513 = vmatpush1.bf16.msra.mxu0 0
        %514 = vmatprep.subr.bf16.mxu0 0
        %515 = vmatpush1.bf16.msra.mxu0 0
        %516 = vmatprep.subr.bf16.mxu0 0
        %517 = vmatpush1.bf16.msra.mxu0 0
        %518 = vmatprep.subr.bf16.mxu0 0
        %519 = vmatpush1.bf16.msra.mxu0 0
        %520 = vmatprep.subr.bf16.mxu0 0
        %521 = vmatpush1.bf16.msra.mxu0 0
        %522 = vmatprep.subr.bf16.mxu0 0
        %523 = vmatpush1.bf16.msra.mxu0 0
        %524 = vmatprep.subr.bf16.mxu0 0
        %525 = vmatpush1.bf16.msra.mxu0 0
        %526 = vmatprep.subr.bf16.mxu0 0
        %527 = vmatpush1.bf16.msra.mxu0 0
        %528 = vmatprep.subr.bf16.mxu0 0
        %529 = vmatpush1.bf16.msra.mxu0 0
        %530 = vmatprep.subr.bf16.mxu0 0
        %531 = vmatpush1.bf16.msra.mxu0 0
        %532 = vmatprep.subr.bf16.mxu0 0
        %533 = vmatpush1.bf16.msra.mxu0 0
        %534 = vmatprep.subr.bf16.mxu0 0
        %535 = vmatpush1.bf16.msra.mxu0 0
        %536 = vmatprep.subr.bf16.mxu0 0
        %537 = vmatpush1.bf16.msra.mxu0 0
        %538 = vmatprep.subr.bf16.mxu0 0
        %539 = vmatpush1.bf16.msra.mxu0 0
        %540 = vmatprep.mubr.bf16.mxu0 0
        %541 = vmatmul.mubr.bf16.gmra.mrb[0].mxu0 %v503
        %v542 = vpop.f32.mrb[0].mxu0
        %v543 = vadd.f32 %v487, %v542
        %v544 = vpop.f32.mrb[0].mxu0
        %v545 = vpop.f32.mrb[0].mxu0
        %v546 = vadd.f32 %v487, %v545
        %v547 = vpop.f32.mrb[0].mxu0
        %548 = vmatprep.mubr.bf16.mxu0 0
        %549 = vmatmul.mubr.bf16.gmra.mrb[0].mxu0 %v506
        %v550 = vpop.f32.mrb[0].mxu0
        %v551 = vadd.f32 %v487, %v550
        %v552 = vpop.f32.mrb[0].mxu0
        %v553 = vpop.f32.mrb[0].mxu0
        %v554 = vpop.f32.mrb[0].mxu0
        %555 = vdwg.mxu0
        %v556 = vpack.c.bf16 %v546, %v543
        %v557 = vpack.c.bf16 %v551, %v551
        %v560 = vunpack.c.l.b16 %v556
        %v561 = vunpack.c.h.b16 %v556
        %v562 = vunpack.c.l.b16 %v557
        %v563 = vpack.c.b16 %v560, %v560
        %v564 = vpack.c.b16 %v561, %v561
        %v565 = vpack.c.b16 %v562, %v562
        %vm569 = vcmask 257024
        %570 = vst.msk [vmem:[%s458] sm:$0xf] %vm569, %v563
        %571 = vst.msk [vmem:[%s458 + $0x4] sm:$0xf] %vm569, %v564
        %572 = vst.msk [vmem:[%s458 + $0x8] sm:$0xf] %vm569, %v565
        %v573 = vld [vmem:[%s402] sm:$0xff]
        %v574 = vld [vmem:[%s402 + $0x8] sm:$0xff]
        %v575 = vld [vmem:[%s402 + $0x10] sm:$0xff]
        %v576 = vpack.c.bf16 %v574, %v573
        %v577 = vpack.c.bf16 %v575, %v575
        %v578 = vld [vmem:[#allocation11] sm:$0xf]
        %v579 = vld [vmem:[#allocation11 + $0x4] sm:$0xf]
        %v580 = vld [vmem:[#allocation11 + $0x8] sm:$0xf]
        %v581 = vld [vmem:[#allocation11 + $0xc] sm:$0xf]
        %v582 = vld [vmem:[#allocation13] sm:$0x1]
        %v584 = vlaneseq
        %v585 = vshrl.u32 %v584, 7
        %v586 = vsub.s32 0, %v585
        %v587 = vrot.slane %v582, %v586
        %v593 = vunpack.c.l.b16 %v578
        %v594 = vunpack.c.l.b16 %v579
        %v595 = vunpack.c.l.b16 %v580
        %v596 = vunpack.c.l.b16 %v581
        %v597 = vpack.c.b16 %v594, %v593
        %v598 = vpack.c.b16 %v596, %v595
        %v602 = vsel %vm501, %v576, 0
        %v605 = vsel %vm501, %v577, 0
        %607 = vmatprep.subr.bf16.mxu0 0
        %608 = vmatpush1.bf16.msra.mxu0 %v597
        %609 = vmatprep.subr.bf16.mxu0 0
        %610 = vmatpush1.bf16.msra.mxu0 %v598
        %611 = vmatprep.subr.bf16.mxu0 0
        %612 = vmatpush1.bf16.msra.mxu0 0
        %613 = vmatprep.subr.bf16.mxu0 0
        %614 = vmatpush1.bf16.msra.mxu0 0
        %615 = vmatprep.subr.bf16.mxu0 0
        %616 = vmatpush1.bf16.msra.mxu0 0
        %617 = vmatprep.subr.bf16.mxu0 0
        %618 = vmatpush1.bf16.msra.mxu0 0
        %619 = vmatprep.subr.bf16.mxu0 0
        %620 = vmatpush1.bf16.msra.mxu0 0
        %621 = vmatprep.subr.bf16.mxu0 0
        %622 = vmatpush1.bf16.msra.mxu0 0
        %623 = vmatprep.subr.bf16.mxu0 0
        %624 = vmatpush1.bf16.msra.mxu0 0
        %625 = vmatprep.subr.bf16.mxu0 0
        %626 = vmatpush1.bf16.msra.mxu0 0
        %627 = vmatprep.subr.bf16.mxu0 0
        %628 = vmatpush1.bf16.msra.mxu0 0
        %629 = vmatprep.subr.bf16.mxu0 0
        %630 = vmatpush1.bf16.msra.mxu0 0
        %631 = vmatprep.subr.bf16.mxu0 0
        %632 = vmatpush1.bf16.msra.mxu0 0
        %633 = vmatprep.subr.bf16.mxu0 0
        %634 = vmatpush1.bf16.msra.mxu0 0
        %635 = vmatprep.subr.bf16.mxu0 0
        %636 = vmatpush1.bf16.msra.mxu0 0
        %637 = vmatprep.subr.bf16.mxu0 0
        %638 = vmatpush1.bf16.msra.mxu0 0
        %639 = vmatprep.mubr.bf16.mxu0 0
        %640 = vmatmul.mubr.bf16.gmra.mrb[0].mxu0 %v602
        %v641 = vpop.f32.mrb[0].mxu0
        %v642 = vadd.f32 %v587, %v641
        %v643 = vpop.f32.mrb[0].mxu0
        %v644 = vpop.f32.mrb[0].mxu0
        %v645 = vadd.f32 %v587, %v644
        %v646 = vpop.f32.mrb[0].mxu0
        %647 = vmatprep.mubr.bf16.mxu0 0
        %648 = vmatmul.mubr.bf16.gmra.mrb[0].mxu0 %v605
        %v649 = vpop.f32.mrb[0].mxu0
        %v650 = vadd.f32 %v587, %v649
        %v651 = vpop.f32.mrb[0].mxu0
        %v652 = vpop.f32.mrb[0].mxu0
        %v653 = vpop.f32.mrb[0].mxu0
        %654 = vdwg.mxu0
        %v655 = vpack.c.bf16 %v645, %v642
        %v656 = vpack.c.bf16 %v650, %v650
        %v659 = vunpack.c.l.b16 %v655
        %v660 = vunpack.c.h.b16 %v655
        %v661 = vunpack.c.l.b16 %v656
        %v662 = vpack.c.b16 %v659, %v659
        %v663 = vpack.c.b16 %v660, %v660
        %v664 = vpack.c.b16 %v661, %v661
        %668 = vst.msk [vmem:[%s465] sm:$0xf] %vm569, %v662
        %669 = vst.msk [vmem:[%s465 + $0x4] sm:$0xf] %vm569, %v663
        %670 = vst.msk [vmem:[%s465 + $0x8] sm:$0xf] %vm569, %v664
        %s671 = sand.u32 %s204, 1
        %s672 = scalar_lea.sflag [#allocation4], %s671
        %s673 = sand.u32 %s204, 1
        %s674 = smul.addr %s673, 12
        %s675 = scalar_lea.vmem [#allocation14], %s674
        %s676 = sand.u32 %s230, 1
        %s677 = scalar_lea.sflag [#allocation16], %s676
        %s678 = sand.u32 %s230, 1
        %s679 = smul.addr %s678, 12
        %s680 = scalar_lea.vmem [#allocation15], %s679
        // Predicated region
        $region77: #{tpu_custom_call.1} parent=47 // pred_check
          %p681 = pneg %p214
        $region78: #{tpu_custom_call.1} parent=47 // pred_check_branch
          %683 = sbr.rel (%p681) target = $region80
        $region79: #{tpu_custom_call.1} parent=47 // pred_region
          %s685 = ssub.s32 192, 192
          %686 = vsyncadd %s672, %s685
          %s687 = smul.addr %s34, 3
          %s688 = smul.addr %s687, 64
          %s689 = scalar_lea.hbm %s7, %s688
          %s690 = sshll.u32 %s675, 4
          %s691 = int_to_ptr.vmem [resolvable:$true] %s690
          %696 = dma.vmem_to_hbm [thread:$0]  %s691, 192, %s689, %s672, 64, 64, 4
        $region80: #{tpu_custom_call.1} parent=47 // pred_fallthru
          _
        // Predicated region
        $region81: #{tpu_custom_call.1} parent=47 // pred_check
          %p697 = pneg %p240
        $region82: #{tpu_custom_call.1} parent=47 // pred_check_branch
          %699 = sbr.rel (%p697) target = $region84
        $region83: #{tpu_custom_call.1} parent=47 // pred_region
          %s701 = ssub.s32 192, 192
          %702 = vsyncadd %s677, %s701
          %s703 = smul.addr %s34, 3
          %s704 = smul.addr %s703, 64
          %s705 = scalar_lea.hbm %s8, %s704
          %s706 = sshll.u32 %s680, 4
          %s707 = int_to_ptr.vmem [resolvable:$true] %s706
          %712 = dma.vmem_to_hbm [thread:$0]  %s707, 192, %s705, %s677, 64, 64, 4
        $region84: #{tpu_custom_call.1} parent=47 // pred_fallthru
          _
      $region48: #{tpu_custom_call.1} parent=5 // pred_fallthru
        _
      %p713 = scmp.le.s32.totalorder 2, %s29
      // Predicated region
      $region85: #{tpu_custom_call.1} parent=5 // pred_check
        %p714 = pneg %p713
      $region86: #{tpu_custom_call.1} parent=5 // pred_check_branch
        %716 = sbr.rel (%p714) target = $region88
      $region87: #{tpu_custom_call.1} parent=5 // pred_region
        %s717 = ssub.s32 %s29, 2
        // Predicated region
        $region89: #{tpu_custom_call.1} parent=87 // pred_check
          %p718 = pneg %p220
        $region90: #{tpu_custom_call.1} parent=87 // pred_check_branch
          %720 = sbr.rel (%p718) target = $region92
        $region91: #{tpu_custom_call.1} parent=87 // pred_region
          %s721 = sand.u32 %s205, 1
          %s722 = scalar_lea.sflag [#allocation4], %s721
          %s723 = sand.u32 %s205, 1
          %s724 = smul.addr %s723, 12
          %s725 = scalar_lea.vmem [#allocation14], %s724
          %726 = dma.done %s722, 192
        $region92: #{tpu_custom_call.1} parent=87 // pred_fallthru
          _
        // Predicated region
        $region93: #{tpu_custom_call.1} parent=87 // pred_check
          %p727 = pneg %p246
        $region94: #{tpu_custom_call.1} parent=87 // pred_check_branch
          %729 = sbr.rel (%p727) target = $region96
        $region95: #{tpu_custom_call.1} parent=87 // pred_region
          %s730 = sand.u32 %s231, 1
          %s731 = scalar_lea.sflag [#allocation16], %s730
          %s732 = sand.u32 %s231, 1
          %s733 = smul.addr %s732, 12
          %s734 = scalar_lea.vmem [#allocation15], %s733
          %735 = dma.done %s731, 192
        $region96: #{tpu_custom_call.1} parent=87 // pred_fallthru
          _
      $region88: #{tpu_custom_call.1} parent=5 // pred_fallthru
        _
    $region6: #{tpu_custom_call.1} parent=1 // loop_footer
      %s33 = sadd.s32 1, %s29
    $region7: #{tpu_custom_call.1} parent=1 // loop_footer_branch
      %28 = sbr.rel target = $region3
    $region8: #{tpu_custom_call.1} parent=1 // loop_exit
      _
    %736 = vsyncpa [#allocation3], 1
    %s737 = scalar_lea.sflag [#allocation3], 1
    %738 = vsyncpa %s737, 1
    %739 = vsyncpa [#allocation6], 1
    %s740 = scalar_lea.sflag [#allocation6], 1
    %741 = vsyncpa %s740, 1
    %742 = vsyncpa [#allocation9], 1
    %743 = vsyncpa [#allocation12], 1
    %744 = vsyncpa [#allocation4], 1
    %s745 = scalar_lea.sflag [#allocation4], 1
    %746 = vsyncpa %s745, 1
    %747 = vsyncpa [#allocation16], 1
    %s748 = scalar_lea.sflag [#allocation16], 1
    %749 = vsyncpa %s748, 1

</llo_original>
